<compile_context>
chip_gen: v7x
topology: tpu7x:2x2x1
jax: 0.10.0
libtpu: 0.0.40
codegen_flags: <defaults>
</compile_context>

<pallas_src>
import jax
import jax.numpy as jnp
from jax.experimental import pallas as pl
from jax.experimental.pallas import tpu as pltpu


def _round_up(x, m):
    return ((x + m - 1) // m) * m


def _cdiv(a, b):
    return -(-a // b)


def _vmem_cap_bytes():
    """Scoped-VMEM ceiling with headroom per device generation."""
    try:
        kind = jax.devices()[0].device_kind.lower()
    except Exception:
        kind = ""
    if "v7" in kind:
        return 48 * 1024 * 1024      # 64 MiB physical per TC on v7x
    return 96 * 1024 * 1024          # 128 MiB physical on v5e / v6e


def _pick_batch_tile(B, *, max_tile=512, min_steps=2):
    """Large tiles amortize the ~0.35us per-grid-step overhead; >= min_steps
    grid steps lets the 'parallel' batch axis shard across v7x's 2 TCs."""
    b16 = _round_up(max(B, 1), 16)   # bf16 sublane multiple
    if b16 <= 16:
        return b16
    steps = max(min_steps, _cdiv(b16, max_tile))
    return min(_round_up(_cdiv(b16, steps), 16), max_tile)


def _pick_hidden_tile(hidden_p, *, max_tile=512):
    """Largest multiple-of-128 divisor of hidden_p that is <= max_tile
    (exact division avoids edge blocks on the contracted hidden axis)."""
    for mult in range(max_tile // 128, 0, -1):
        t = 128 * mult
        if hidden_p % t == 0:
            return t
    return 128


# ---------------------------------------------------------------------------
# Kernels
# ---------------------------------------------------------------------------

def _mlp_resident_kernel(x_ref, w1_ref, b1_ref, w2_ref, b2_ref, o_ref):
    # fc1 on the MXU (bf16 in, f32 accumulate), bias + ReLU in f32, then fc2.
    h = jnp.dot(x_ref[...], w1_ref[...], preferred_element_type=jnp.float32)
    h = jnp.maximum(h + b1_ref[...], 0.0)
    y = jnp.dot(h.astype(w2_ref.dtype), w2_ref[...],
                preferred_element_type=jnp.float32)
    o_ref[...] = (y + b2_ref[...]).astype(o_ref.dtype)


def _mlp_hidden_tiled_kernel(x_ref, w1_ref, b1_ref, w2_ref, b2_ref, o_ref,
                             acc_ref):
    # ReLU is elementwise along hidden, so the forward decomposes exactly as
    #   y = sum_j relu(x @ W1[:, j] + b1[j]) @ W2[j, :]  + b2
    j = pl.program_id(1)

    @pl.when(j == 0)
    def _():
        acc_ref[...] = jnp.zeros_like(acc_ref)

    h = jnp.dot(x_ref[...], w1_ref[...], preferred_element_type=jnp.float32)
    h = jnp.maximum(h + b1_ref[...], 0.0)
    acc_ref[...] += jnp.dot(h.astype(w2_ref.dtype), w2_ref[...],
                            preferred_element_type=jnp.float32)

    @pl.when(j == pl.num_programs(1) - 1)
    def _():
        o_ref[...] = (acc_ref[...] + b2_ref[...]).astype(o_ref.dtype)


# ---------------------------------------------------------------------------
# Wrapper
# ---------------------------------------------------------------------------

def prepare_mlp_params(w1, b1, w2, b2, *, compute_dtype=jnp.bfloat16):
    """Pad feature dims to lane-dense multiples of 128 and cast to the MXU
    compute dtype ONCE; cache the result so per-call work only touches x.

    w1: [in, hidden]; b1: [hidden] or [1, hidden];
    w2: [hidden, out]; b2: [out] or [1, out]."""
    input_dim, hidden = w1.shape
    hidden2, out_dim = w2.shape
    assert hidden == hidden2
    b1 = jnp.reshape(b1, (1, hidden))
    b2 = jnp.reshape(b2, (1, out_dim))

    in_p = _round_up(input_dim, 128)
    hidden_p = _round_up(hidden, 128)
    out_p = _round_up(out_dim, 128)

    # Zero padding is exact: padded K rows/cols contribute 0, padded hidden
    # columns give ReLU(0)=0 and meet zero rows of w2, padded out columns are
    # sliced off.
    w1_p = jnp.pad(w1, ((0, in_p - input_dim),
                        (0, hidden_p - hidden))).astype(compute_dtype)
    b1_p = jnp.pad(b1, ((0, 0), (0, hidden_p - hidden))).astype(jnp.float32)
    w2_p = jnp.pad(w2, ((0, hidden_p - hidden),
                        (0, out_p - out_dim))).astype(compute_dtype)
    b2_p = jnp.pad(b2, ((0, 0), (0, out_p - out_dim))).astype(jnp.float32)

    meta = dict(input_dim=input_dim, hidden=hidden, out_dim=out_dim,
                in_p=in_p, hidden_p=hidden_p, out_p=out_p,
                compute_dtype=compute_dtype)
    return (w1_p, b1_p, w2_p, b2_p), meta


def mlp_forward(x, padded_params, meta, *, batch_tile=None, out_dtype=None,
                force_hidden_tiled=False, hidden_tile=None):
    """x: [..., input_dim] -> [..., output_dim] (out_dtype defaults to x.dtype)."""
    w1_p, b1_p, w2_p, b2_p = padded_params
    orig_shape = x.shape
    if x.ndim != 2:
        x = x.reshape(-1, orig_shape[-1])
    B, input_dim = x.shape
    assert input_dim == meta["input_dim"]

    in_p, hidden_p, out_p = meta["in_p"], meta["hidden_p"], meta["out_p"]
    out_dim = meta["out_dim"]
    cdt = meta["compute_dtype"]
    out_dtype = out_dtype or x.dtype

    if batch_tile is None:
        batch_tile = _pick_batch_tile(B)
    b_pad = _round_up(max(B, 1), batch_tile)
    n_b = b_pad // batch_tile

    # Per-call work on x only: batch pad (tiny) + lane-dense K pad, fused with
    # the compute-dtype cast -> at most one pass over x.
    pad_b, pad_k = b_pad - B, in_p - input_dim
    x_p = x
    if pad_b or pad_k:
        x_p = jnp.pad(x_p, ((0, pad_b), (0, pad_k)))
    if x_p.dtype != cdt:
        x_p = x_p.astype(cdt)

    vmem_cap = _vmem_cap_bytes()
    cdt_sz = jnp.dtype(cdt).itemsize
    out_sz = jnp.dtype(out_dtype).itemsize

    # Resident-weight VMEM budget: double-buffered x/out tiles, single-copy
    # weights, f32 biases, plus the (batch_tile, hidden_p) f32 intermediate.
    resident_bytes = (2 * batch_tile * in_p * cdt_sz
                      + 2 * batch_tile * out_p * out_sz
                      + in_p * hidden_p * cdt_sz
                      + hidden_p * out_p * cdt_sz
                      + 4 * (hidden_p + out_p)
                      + 4 * batch_tile * hidden_p)
    use_resident = (not force_hidden_tiled) and \
        resident_bytes <= int(0.7 * vmem_cap)

    # Advisory cost estimate for XLA's scheduler.
    flops = 2 * b_pad * (in_p * hidden_p + hidden_p * out_p)
    bytes_accessed = (x_p.size * cdt_sz
                      + w1_p.size * cdt_sz + w2_p.size * cdt_sz
                      + b1_p.size * 4 + b2_p.size * 4
                      + b_pad * out_p * out_sz)
    cost = pl.CostEstimate(flops=flops, transcendentals=0,
                           bytes_accessed=bytes_accessed)

    if use_resident:
        # Constant index_map -> weights fetched once; single-buffered to halve
        # their resident VMEM footprint.
        resident = pl.Buffered(1)
        out = pl.pallas_call(
            _mlp_resident_kernel,
            out_shape=jax.ShapeDtypeStruct((b_pad, out_p), out_dtype),
            grid_spec=pltpu.PrefetchScalarGridSpec(
                num_scalar_prefetch=0,
                grid=(n_b,),
                in_specs=[
                    pl.BlockSpec((batch_tile, in_p), lambda i: (i, 0)),
                    pl.BlockSpec((in_p, hidden_p), lambda i: (0, 0),
                                 pipeline_mode=resident),
                    pl.BlockSpec((1, hidden_p), lambda i: (0, 0),
                                 pipeline_mode=resident),
                    pl.BlockSpec((hidden_p, out_p), lambda i: (0, 0),
                                 pipeline_mode=resident),
                    pl.BlockSpec((1, out_p), lambda i: (0, 0),
                                 pipeline_mode=resident),
                ],
                out_specs=pl.BlockSpec((batch_tile, out_p), lambda i: (i, 0)),
            ),
            compiler_params=pltpu.CompilerParams(
                dimension_semantics=("parallel",),
                vmem_limit_bytes=vmem_cap),
            cost_estimate=cost,
        )(x_p, w1_p, b1_p, w2_p, b2_p)
    else:
        # Hidden-tiled path: tile w1 columns / w2 rows, accumulate fc2 output
        # in an f32 scratch across the (last, "arbitrary") hidden grid axis.
        if hidden_tile is None:
            hidden_tile = _pick_hidden_tile(hidden_p)
        assert hidden_p % hidden_tile == 0
        n_h = hidden_p // hidden_tile
        out = pl.pallas_call(
            _mlp_hidden_tiled_kernel,
            out_shape=jax.ShapeDtypeStruct((b_pad, out_p), out_dtype),
            grid_spec=pltpu.PrefetchScalarGridSpec(
                num_scalar_prefetch=0,
                grid=(n_b, n_h),
                in_specs=[
                    pl.BlockSpec((batch_tile, in_p), lambda i, j: (i, 0)),
                    pl.BlockSpec((in_p, hidden_tile), lambda i, j: (0, j)),
                    pl.BlockSpec((1, hidden_tile), lambda i, j: (0, j)),
                    pl.BlockSpec((hidden_tile, out_p), lambda i, j: (j, 0)),
                    pl.BlockSpec((1, out_p), lambda i, j: (0, 0)),
                ],
                out_specs=pl.BlockSpec((batch_tile, out_p),
                                       lambda i, j: (i, 0)),
                scratch_shapes=[pltpu.VMEM((batch_tile, out_p), jnp.float32)],
            ),
            compiler_params=pltpu.CompilerParams(
                dimension_semantics=("parallel", "arbitrary"),
                vmem_limit_bytes=vmem_cap),
            cost_estimate=cost,
        )(x_p, w1_p, b1_p, w2_p, b2_p)

    # Slice only if actually padded (avoids an extra full-output HBM copy).
    if b_pad != B or out_p != out_dim:
        out = out[:B, :out_dim]
    if len(orig_shape) != 2:
        out = out.reshape(*orig_shape[:-1], out_dim)
    return out


def init_mlp_params(key, input_dim, output_dim, dtype=jnp.float32):
    """Deterministic init mimicking torch.nn.Linear default
    (uniform(-1/sqrt(fan_in), 1/sqrt(fan_in)))."""
    hidden = input_dim * 2
    k1, k2, k3, k4 = jax.random.split(key, 4)
    bound1 = 1.0 / (input_dim ** 0.5)
    bound2 = 1.0 / (hidden ** 0.5)
    w1 = jax.random.uniform(k1, (input_dim, hidden), dtype, -bound1, bound1)
    b1 = jax.random.uniform(k2, (hidden,), dtype, -bound1, bound1)
    w2 = jax.random.uniform(k3, (hidden, output_dim), dtype, -bound2, bound2)
    b2 = jax.random.uniform(k4, (output_dim,), dtype, -bound2, bound2)
    return w1, b1, w2, b2


if __name__ == "__main__":
    key = jax.random.PRNGKey(0)
    k_x, k_p, k_x2, k_p2 = jax.random.split(key, 4)

    # --- Test 1: tiny shapes -> resident-weight path -------------------------
    B, input_dim, output_dim = 8, 32, 16            # hidden = 2 * input_dim = 64
    x = jax.random.normal(k_x, (B, input_dim), dtype=jnp.float32)
    w1, b1, w2, b2 = init_mlp_params(k_p, input_dim, output_dim)
    params, meta = prepare_mlp_params(w1, b1, w2, b2)       # once, not per call

    y = jax.block_until_ready(mlp_forward(x, params, meta))
    ref = jnp.maximum(x @ w1 + b1, 0.0) @ w2 + b2
    assert y.shape == (B, output_dim)
    assert jnp.allclose(y, ref, atol=5e-2, rtol=5e-2), "mismatch (resident path)"

    # --- Test 2: hidden-tiled accumulator path (forced, 2x2 grid) ------------
    B2, input_dim2, output_dim2 = 32, 128, 128      # hidden = 256 -> 2 tiles of 128
    x2 = jax.random.normal(k_x2, (B2, input_dim2), dtype=jnp.float32)
    w1b, b1b, w2b, b2b = init_mlp_params(k_p2, input_dim2, output_dim2)
    params2, meta2 = prepare_mlp_params(w1b, b1b, w2b, b2b)

    y2 = jax.block_until_ready(
        mlp_forward(x2, params2, meta2, force_hidden_tiled=True,
                    hidden_tile=128))
    ref2 = jnp.maximum(x2 @ w1b + b1b, 0.0) @ w2b + b2b
    assert y2.shape == (B2, output_dim2)
    assert jnp.allclose(y2, ref2, atol=5e-2, rtol=5e-2), "mismatch (tiled path)"

    print("KERNEL_OK")
</pallas_src>

<mosaic_0001>
module attributes {stable_mosaic.version = 11 : i64} {
  func.func @_mlp_resident_kernel(%arg0: i32, %arg1: memref<16x128xbf16, #tpu.memory_space<vmem>>, %arg2: memref<128x128xbf16, #tpu.memory_space<vmem>>, %arg3: memref<1x128xf32, #tpu.memory_space<vmem>>, %arg4: memref<128x128xbf16, #tpu.memory_space<vmem>>, %arg5: memref<1x128xf32, #tpu.memory_space<vmem>>, %arg6: memref<16x128xf32, #tpu.memory_space<vmem>>) attributes {dimension_semantics = [#tpu.dimension_semantics<parallel>], iteration_bounds = array<i64: 1>, scalar_prefetch = 0 : i64, scratch_operands = 0 : i64, tpu.core_type = #tpu.core_type<tc>, window_params = [{transform_indices = @transform_0, window_bounds = array<i64: 16, 128>}, {pipeline_mode = #tpu.pipeline_mode<synchronous>, transform_indices = @transform_1, window_bounds = array<i64: 128, 128>}, {pipeline_mode = #tpu.pipeline_mode<synchronous>, transform_indices = @transform_2, window_bounds = array<i64: 1, 128>}, {pipeline_mode = #tpu.pipeline_mode<synchronous>, transform_indices = @transform_3, window_bounds = array<i64: 128, 128>}, {pipeline_mode = #tpu.pipeline_mode<synchronous>, transform_indices = @transform_4, window_bounds = array<i64: 1, 128>}, {transform_indices = @transform_5, window_bounds = array<i64: 16, 128>}]} {
    %c0 = arith.constant 0 : index
    %c0_0 = arith.constant 0 : index
    %0 = vector.load %arg1[%c0, %c0_0] : memref<16x128xbf16, #tpu.memory_space<vmem>>, vector<16x128xbf16>
    %c0_1 = arith.constant 0 : index
    %c0_2 = arith.constant 0 : index
    %1 = vector.load %arg2[%c0_1, %c0_2] : memref<128x128xbf16, #tpu.memory_space<vmem>>, vector<128x128xbf16>
    %cst = arith.constant dense<0.000000e+00> : vector<16x128xf32>
    %2 = tpu.matmul %0, %1, %cst {dimension_numbers = #tpu.dot_dimension_numbers<[1], [0], [0], [1], [0, 0, 1, 1], [], []>} : vector<16x128xbf16>, vector<128x128xbf16>, vector<16x128xf32> -> vector<16x128xf32>
    %c0_3 = arith.constant 0 : index
    %c0_4 = arith.constant 0 : index
    %3 = vector.load %arg3[%c0_3, %c0_4] : memref<1x128xf32, #tpu.memory_space<vmem>>, vector<1x128xf32>
    %4 = vector.broadcast %3 : vector<1x128xf32> to vector<16x128xf32>
    %5 = arith.addf %2, %4 : vector<16x128xf32>
    %cst_5 = arith.constant 0.000000e+00 : f32
    %6 = vector.broadcast %cst_5 : f32 to vector<16x128xf32>
    %7 = arith.maximumf %5, %6 : vector<16x128xf32>
    %8 = arith.truncf %7 : vector<16x128xf32> to vector<16x128xbf16>
    %c0_6 = arith.constant 0 : index
    %c0_7 = arith.constant 0 : index
    %9 = vector.load %arg4[%c0_6, %c0_7] : memref<128x128xbf16, #tpu.memory_space<vmem>>, vector<128x128xbf16>
    %cst_8 = arith.constant dense<0.000000e+00> : vector<16x128xf32>
    %10 = tpu.matmul %8, %9, %cst_8 {dimension_numbers = #tpu.dot_dimension_numbers<[1], [0], [0], [1], [0, 0, 1, 1], [], []>} : vector<16x128xbf16>, vector<128x128xbf16>, vector<16x128xf32> -> vector<16x128xf32>
    %c0_9 = arith.constant 0 : index
    %c0_10 = arith.constant 0 : index
    %11 = vector.load %arg5[%c0_9, %c0_10] : memref<1x128xf32, #tpu.memory_space<vmem>>, vector<1x128xf32>
    %12 = vector.broadcast %11 : vector<1x128xf32> to vector<16x128xf32>
    %13 = arith.addf %10, %12 : vector<16x128xf32>
    %c0_11 = arith.constant 0 : index
    %c0_12 = arith.constant 0 : index
    %14 = vector.load %arg6[%c0_11, %c0_12] : memref<16x128xf32, #tpu.memory_space<vmem>>, vector<16x128xf32>
    tpu.vector_store %arg6[%c0_11, %c0_12], %13 {strides = array<i32>} : memref<16x128xf32, #tpu.memory_space<vmem>>, vector<16x128xf32>,
    return
  }
  func.func @transform_0(%arg0: i32) -> (i32, i32) {
    %c0_i32 = arith.constant 0 : i32
    %c0_i32_0 = arith.constant 0 : i32
    return %arg0, %c0_i32 : i32, i32
  }
  func.func @transform_1(%arg0: i32) -> (i32, i32) {
    %c0_i32 = arith.constant 0 : i32
    %c0_i32_0 = arith.constant 0 : i32
    %c0_i32_1 = arith.constant 0 : i32
    return %c0_i32, %c0_i32_0 : i32, i32
  }
  func.func @transform_2(%arg0: i32) -> (i32, i32) {
    %c0_i32 = arith.constant 0 : i32
    %c0_i32_0 = arith.constant 0 : i32
    %c0_i32_1 = arith.constant 0 : i32
    return %c0_i32, %c0_i32_0 : i32, i32
  }
  func.func @transform_3(%arg0: i32) -> (i32, i32) {
    %c0_i32 = arith.constant 0 : i32
    %c0_i32_0 = arith.constant 0 : i32
    %c0_i32_1 = arith.constant 0 : i32
    return %c0_i32, %c0_i32_0 : i32, i32
  }
  func.func @transform_4(%arg0: i32) -> (i32, i32) {
    %c0_i32 = arith.constant 0 : i32
    %c0_i32_0 = arith.constant 0 : i32
    %c0_i32_1 = arith.constant 0 : i32
    return %c0_i32, %c0_i32_0 : i32, i32
  }
  func.func @transform_5(%arg0: i32) -> (i32, i32) {
    %c0_i32 = arith.constant 0 : i32
    %c0_i32_0 = arith.constant 0 : i32
    return %arg0, %c0_i32 : i32, i32
  }
}

</mosaic_0001>

<llo_original>
// kernel: tpu_custom_call.1
$region0: #{tpu_custom_call.1}
  #allocation0 [shape = 'u32[]', space=smem, size = 0x4, offset = 0x4, fixed_abs, tag = 'smem constant byte address 0x4 - core index']
  #allocation1 [shape = 'u32[144,128]{1,0:T(1,128)}', space=vmem, size = 0x12000, scoped, tag = 'internal scratch']
  %s0 = inlined_call_operand.hbm [shape: bf16[16,128], index: 0, kind: input, shape index: {}]
  %s1 = inlined_call_operand.hbm [shape: bf16[128,128], index: 1, kind: input, shape index: {}]
  %s2 = inlined_call_operand.hbm [shape: f32[1,128], index: 2, kind: input, shape index: {}]
  %s3 = inlined_call_operand.hbm [shape: bf16[128,128], index: 3, kind: input, shape index: {}]
  %s4 = inlined_call_operand.hbm [shape: f32[1,128], index: 4, kind: input, shape index: {}]
  %s5 = inlined_call_operand.hbm [shape: f32[16,128], index: 5, kind: output, shape index: {}]
  %s6 = sld [smem:[#allocation0]]
  $region50: #{tpu_custom_call.1} parent=0
    _
  %s8 = ssub.s32 1, %s6
  %s9 = scalar_select 0, %s8, %s6
  $region1: #{tpu_custom_call.1} parent=0
    #allocation2 [shape = 'u8[4096]{0}', space=vmem, size = 0x1000, scoped, tag = 'input window, operand 0, single buffered']
    #allocation3 [shape = 's32[1]{0}', space=sflag, size = 0x4, scoped, tag = 'scoped memory for tpu_custom_call.1']
    #allocation4 [shape = 's32[1]{0}', space=sflag, size = 0x4, scoped, tag = 'scoped memory for tpu_custom_call.1']
    #allocation5 [shape = 'u8[32768]{0}', space=vmem, size = 0x8000, scoped, tag = 'input window, operand 1, single buffered']
    #allocation6 [shape = 's32[1]{0}', space=sflag, size = 0x4, scoped, tag = 'scoped memory for tpu_custom_call.1']
    #allocation7 [shape = 'u8[512]{0}', space=vmem, size = 0x400, scoped, tag = 'input window, operand 2, single buffered']
    #allocation8 [shape = 'u8[32768]{0}', space=vmem, size = 0x8000, scoped, tag = 'input window, operand 3, single buffered']
    #allocation9 [shape = 's32[1]{0}', space=sflag, size = 0x4, scoped, tag = 'scoped memory for tpu_custom_call.1']
    #allocation10 [shape = 'u8[512]{0}', space=vmem, size = 0x400, scoped, tag = 'input window, operand 4, single buffered']
    #allocation11 [shape = 'u8[8192]{0}', space=vmem, size = 0x2000, scoped, tag = 'output window, operand 0, single buffered']
    %10 = vsyncpa [#allocation3], 0
    %11 = vsyncpa [#allocation6], 0
    %12 = vsyncpa [#allocation9], 0
    %13 = vsyncpa [#allocation4], 0
    // Predicated region
    $region2: #{tpu_custom_call.1} parent=1 // pred_check
      _
    $region3: #{tpu_custom_call.1} parent=1 // pred_check_branch
      %15 = sbr.rel (0) target = $region5
    $region4: #{tpu_custom_call.1} parent=1 // pred_region
      %s17 = ssub.s32 128, 128
      %18 = vsyncadd [#allocation3], %s17
      %s19 = sshll.u32 [#allocation2], 4
      %s20 = int_to_ptr.vmem [resolvable:$true] %s19
      %25 = dma.hbm_to_vmem [thread:$0]  %s0, 128, %s20, [#allocation3], 64, 64, 4
    $region5: #{tpu_custom_call.1} parent=1 // pred_fallthru
      _
    // Predicated region
    $region6: #{tpu_custom_call.1} parent=1 // pred_check
      _
    $region7: #{tpu_custom_call.1} parent=1 // pred_check_branch
      %27 = sbr.rel (0) target = $region9
    $region8: #{tpu_custom_call.1} parent=1 // pred_region
      %s29 = ssub.s32 1024, 1024
      %30 = vsyncadd [#allocation6], %s29
      %s31 = sshll.u32 [#allocation5], 4
      %s32 = int_to_ptr.vmem [resolvable:$true] %s31
      %37 = dma.hbm_to_vmem [thread:$0]  %s1, 1024, %s32, [#allocation6], 64, 64, 4
    $region9: #{tpu_custom_call.1} parent=1 // pred_fallthru
      _
    // Predicated region
    $region10: #{tpu_custom_call.1} parent=1 // pred_check
      _
    $region11: #{tpu_custom_call.1} parent=1 // pred_check_branch
      %39 = sbr.rel (0) target = $region13
    $region12: #{tpu_custom_call.1} parent=1 // pred_region
      %s41 = ssub.s32 16, 16
      %42 = vsyncadd [#allocation6], %s41
      %s44 = sshll.u32 [#allocation7], 4
      %s45 = int_to_ptr.vmem [resolvable:$true] %s44
      %47 = dma.hbm_to_vmem [thread:$0]  %s2, 16, %s45, [#allocation6]
    $region13: #{tpu_custom_call.1} parent=1 // pred_fallthru
      _
    // Predicated region
    $region14: #{tpu_custom_call.1} parent=1 // pred_check
      _
    $region15: #{tpu_custom_call.1} parent=1 // pred_check_branch
      %49 = sbr.rel (0) target = $region17
    $region16: #{tpu_custom_call.1} parent=1 // pred_region
      %s51 = ssub.s32 1024, 1024
      %52 = vsyncadd [#allocation9], %s51
      %s53 = sshll.u32 [#allocation8], 4
      %s54 = int_to_ptr.vmem [resolvable:$true] %s53
      %59 = dma.hbm_to_vmem [thread:$0]  %s3, 1024, %s54, [#allocation9], 64, 64, 4
    $region17: #{tpu_custom_call.1} parent=1 // pred_fallthru
      _
    // Predicated region
    $region18: #{tpu_custom_call.1} parent=1 // pred_check
      _
    $region19: #{tpu_custom_call.1} parent=1 // pred_check_branch
      %61 = sbr.rel (0) target = $region21
    $region20: #{tpu_custom_call.1} parent=1 // pred_region
      %s63 = ssub.s32 16, 16
      %64 = vsyncadd [#allocation9], %s63
      %s66 = sshll.u32 [#allocation10], 4
      %s67 = int_to_ptr.vmem [resolvable:$true] %s66
      %69 = dma.hbm_to_vmem [thread:$0]  %s4, 16, %s67, [#allocation9]
    $region21: #{tpu_custom_call.1} parent=1 // pred_fallthru
      _
    // Predicated region
    $region22: #{tpu_custom_call.1} parent=1 // pred_check
      _
    $region23: #{tpu_custom_call.1} parent=1 // pred_check_branch
      %71 = sbr.rel (0) target = $region25
    $region24: #{tpu_custom_call.1} parent=1 // pred_region
      %72 = dma.done [#allocation3], 128
    $region25: #{tpu_custom_call.1} parent=1 // pred_fallthru
      _
    // Predicated region
    $region26: #{tpu_custom_call.1} parent=1 // pred_check
      _
    $region27: #{tpu_custom_call.1} parent=1 // pred_check_branch
      %74 = sbr.rel (0) target = $region29
    $region28: #{tpu_custom_call.1} parent=1 // pred_region
      %75 = dma.done [#allocation6], 1024
    $region29: #{tpu_custom_call.1} parent=1 // pred_fallthru
      _
    // Predicated region
    $region30: #{tpu_custom_call.1} parent=1 // pred_check
      _
    $region31: #{tpu_custom_call.1} parent=1 // pred_check_branch
      %77 = sbr.rel (0) target = $region33
    $region32: #{tpu_custom_call.1} parent=1 // pred_region
      %78 = dma.done [#allocation6], 16
    $region33: #{tpu_custom_call.1} parent=1 // pred_fallthru
      _
    // Predicated region
    $region34: #{tpu_custom_call.1} parent=1 // pred_check
      _
    $region35: #{tpu_custom_call.1} parent=1 // pred_check_branch
      %80 = sbr.rel (0) target = $region37
    $region36: #{tpu_custom_call.1} parent=1 // pred_region
      %81 = dma.done [#allocation9], 1024
    $region37: #{tpu_custom_call.1} parent=1 // pred_fallthru
      _
    // Predicated region
    $region38: #{tpu_custom_call.1} parent=1 // pred_check
      _
    $region39: #{tpu_custom_call.1} parent=1 // pred_check_branch
      %83 = sbr.rel (0) target = $region41
    $region40: #{tpu_custom_call.1} parent=1 // pred_region
      %84 = dma.done [#allocation9], 16
    $region41: #{tpu_custom_call.1} parent=1 // pred_fallthru
      _
    %v86 = vld [vmem:[#allocation2] sm:$0xf]
    %v87 = vld [vmem:[#allocation2 + $0x4] sm:$0xf]
    %v88 = vld [vmem:[#allocation5] sm:$0xf]
    %v89 = vld [vmem:[#allocation5 + $0x4] sm:$0xf]
    %v90 = vld [vmem:[#allocation5 + $0x8] sm:$0xf]
    %v91 = vld [vmem:[#allocation5 + $0xc] sm:$0xf]
    %v92 = vld [vmem:[#allocation5 + $0x10] sm:$0xf]
    %v93 = vld [vmem:[#allocation5 + $0x14] sm:$0xf]
    %v94 = vld [vmem:[#allocation5 + $0x18] sm:$0xf]
    %v95 = vld [vmem:[#allocation5 + $0x1c] sm:$0xf]
    %v96 = vld [vmem:[#allocation5 + $0x20] sm:$0xf]
    %v97 = vld [vmem:[#allocation5 + $0x24] sm:$0xf]
    %v98 = vld [vmem:[#allocation5 + $0x28] sm:$0xf]
    %v99 = vld [vmem:[#allocation5 + $0x2c] sm:$0xf]
    %v100 = vld [vmem:[#allocation5 + $0x30] sm:$0xf]
    %v101 = vld [vmem:[#allocation5 + $0x34] sm:$0xf]
    %v102 = vld [vmem:[#allocation5 + $0x38] sm:$0xf]
    %v103 = vld [vmem:[#allocation5 + $0x3c] sm:$0xf]
    %v104 = vld [vmem:[#allocation7] sm:$0x1]
    %v106 = vlaneseq
    %v107 = vshrl.u32 %v106, 7
    %v108 = vsub.s32 0, %v107
    %v109 = vrot.slane %v104, %v108
    %v113 = vunpack.c.l.b16 %v86
    %v114 = vunpack.c.l.b16 %v87
    %v115 = vpack.c.b16 %v114, %v113
    %v133 = vunpack.c.l.b16 %v88
    %v134 = vunpack.c.l.b16 %v89
    %v135 = vunpack.c.l.b16 %v90
    %v136 = vunpack.c.l.b16 %v91
    %v137 = vunpack.c.l.b16 %v92
    %v138 = vunpack.c.l.b16 %v93
    %v139 = vunpack.c.l.b16 %v94
    %v140 = vunpack.c.l.b16 %v95
    %v141 = vunpack.c.l.b16 %v96
    %v142 = vunpack.c.l.b16 %v97
    %v143 = vunpack.c.l.b16 %v98
    %v144 = vunpack.c.l.b16 %v99
    %v145 = vunpack.c.l.b16 %v100
    %v146 = vunpack.c.l.b16 %v101
    %v147 = vunpack.c.l.b16 %v102
    %v148 = vunpack.c.l.b16 %v103
    %v149 = vpack.c.b16 %v134, %v133
    %v150 = vpack.c.b16 %v136, %v135
    %v151 = vpack.c.b16 %v138, %v137
    %v152 = vpack.c.b16 %v140, %v139
    %v153 = vpack.c.b16 %v142, %v141
    %v154 = vpack.c.b16 %v144, %v143
    %v155 = vpack.c.b16 %v146, %v145
    %v156 = vpack.c.b16 %v148, %v147
    %165 = vmatprep.subr.bf16.mxu0 0
    %166 = vmatpush1.bf16.msra.mxu0 %v149
    %167 = vmatprep.subr.bf16.mxu0 0
    %168 = vmatpush1.bf16.msra.mxu0 %v150
    %169 = vmatprep.subr.bf16.mxu0 0
    %170 = vmatpush1.bf16.msra.mxu0 %v151
    %171 = vmatprep.subr.bf16.mxu0 0
    %172 = vmatpush1.bf16.msra.mxu0 %v152
    %173 = vmatprep.subr.bf16.mxu0 0
    %174 = vmatpush1.bf16.msra.mxu0 %v153
    %175 = vmatprep.subr.bf16.mxu0 0
    %176 = vmatpush1.bf16.msra.mxu0 %v154
    %177 = vmatprep.subr.bf16.mxu0 0
    %178 = vmatpush1.bf16.msra.mxu0 %v155
    %179 = vmatprep.subr.bf16.mxu0 0
    %180 = vmatpush1.bf16.msra.mxu0 %v156
    %181 = vmatprep.subr.bf16.mxu0 0
    %182 = vmatpush1.bf16.msra.mxu0 0
    %183 = vmatprep.subr.bf16.mxu0 0
    %184 = vmatpush1.bf16.msra.mxu0 0
    %185 = vmatprep.subr.bf16.mxu0 0
    %186 = vmatpush1.bf16.msra.mxu0 0
    %187 = vmatprep.subr.bf16.mxu0 0
    %188 = vmatpush1.bf16.msra.mxu0 0
    %189 = vmatprep.subr.bf16.mxu0 0
    %190 = vmatpush1.bf16.msra.mxu0 0
    %191 = vmatprep.subr.bf16.mxu0 0
    %192 = vmatpush1.bf16.msra.mxu0 0
    %193 = vmatprep.subr.bf16.mxu0 0
    %194 = vmatpush1.bf16.msra.mxu0 0
    %195 = vmatprep.subr.bf16.mxu0 0
    %196 = vmatpush1.bf16.msra.mxu0 0
    %197 = vmatprep.mubr.bf16.mxu0 0
    %198 = vmatmul.mubr.bf16.gmra.mrb[0].mxu0 %v115
    %v199 = vpop.f32.mrb[0].mxu0
    %v200 = vadd.f32 %v109, %v199
    %v201 = vpop.f32.mrb[0].mxu0
    %v202 = vpop.f32.mrb[0].mxu0
    %v203 = vadd.f32 %v109, %v202
    %v204 = vpop.f32.mrb[0].mxu0
    %205 = vdwg.mxu0
    %v206 = vmax.f32 %v200, 0.0
    %v207 = vmax.f32 %v203, 0.0
    %v208 = vpack.c.bf16 %v207, %v206
    %v209 = vld [vmem:[#allocation8] sm:$0xf]
    %v210 = vld [vmem:[#allocation8 + $0x4] sm:$0xf]
    %v211 = vld [vmem:[#allocation8 + $0x8] sm:$0xf]
    %v212 = vld [vmem:[#allocation8 + $0xc] sm:$0xf]
    %v213 = vld [vmem:[#allocation8 + $0x10] sm:$0xf]
    %v214 = vld [vmem:[#allocation8 + $0x14] sm:$0xf]
    %v215 = vld [vmem:[#allocation8 + $0x18] sm:$0xf]
    %v216 = vld [vmem:[#allocation8 + $0x1c] sm:$0xf]
    %v217 = vld [vmem:[#allocation8 + $0x20] sm:$0xf]
    %v218 = vld [vmem:[#allocation8 + $0x24] sm:$0xf]
    %v219 = vld [vmem:[#allocation8 + $0x28] sm:$0xf]
    %v220 = vld [vmem:[#allocation8 + $0x2c] sm:$0xf]
    %v221 = vld [vmem:[#allocation8 + $0x30] sm:$0xf]
    %v222 = vld [vmem:[#allocation8 + $0x34] sm:$0xf]
    %v223 = vld [vmem:[#allocation8 + $0x38] sm:$0xf]
    %v224 = vld [vmem:[#allocation8 + $0x3c] sm:$0xf]
    %v225 = vld [vmem:[#allocation10] sm:$0x1]
    %v227 = vlaneseq
    %v228 = vshrl.u32 %v227, 7
    %v229 = vsub.s32 0, %v228
    %v230 = vrot.slane %v225, %v229
    %v248 = vunpack.c.l.b16 %v209
    %v249 = vunpack.c.l.b16 %v210
    %v250 = vunpack.c.l.b16 %v211
    %v251 = vunpack.c.l.b16 %v212
    %v252 = vunpack.c.l.b16 %v213
    %v253 = vunpack.c.l.b16 %v214
    %v254 = vunpack.c.l.b16 %v215
    %v255 = vunpack.c.l.b16 %v216
    %v256 = vunpack.c.l.b16 %v217
    %v257 = vunpack.c.l.b16 %v218
    %v258 = vunpack.c.l.b16 %v219
    %v259 = vunpack.c.l.b16 %v220
    %v260 = vunpack.c.l.b16 %v221
    %v261 = vunpack.c.l.b16 %v222
    %v262 = vunpack.c.l.b16 %v223
    %v263 = vunpack.c.l.b16 %v224
    %v264 = vpack.c.b16 %v249, %v248
    %v265 = vpack.c.b16 %v251, %v250
    %v266 = vpack.c.b16 %v253, %v252
    %v267 = vpack.c.b16 %v255, %v254
    %v268 = vpack.c.b16 %v257, %v256
    %v269 = vpack.c.b16 %v259, %v258
    %v270 = vpack.c.b16 %v261, %v260
    %v271 = vpack.c.b16 %v263, %v262
    %280 = vmatprep.subr.bf16.mxu0 0
    %281 = vmatpush1.bf16.msra.mxu0 %v264
    %282 = vmatprep.subr.bf16.mxu0 0
    %283 = vmatpush1.bf16.msra.mxu0 %v265
    %284 = vmatprep.subr.bf16.mxu0 0
    %285 = vmatpush1.bf16.msra.mxu0 %v266
    %286 = vmatprep.subr.bf16.mxu0 0
    %287 = vmatpush1.bf16.msra.mxu0 %v267
    %288 = vmatprep.subr.bf16.mxu0 0
    %289 = vmatpush1.bf16.msra.mxu0 %v268
    %290 = vmatprep.subr.bf16.mxu0 0
    %291 = vmatpush1.bf16.msra.mxu0 %v269
    %292 = vmatprep.subr.bf16.mxu0 0
    %293 = vmatpush1.bf16.msra.mxu0 %v270
    %294 = vmatprep.subr.bf16.mxu0 0
    %295 = vmatpush1.bf16.msra.mxu0 %v271
    %296 = vmatprep.subr.bf16.mxu0 0
    %297 = vmatpush1.bf16.msra.mxu0 0
    %298 = vmatprep.subr.bf16.mxu0 0
    %299 = vmatpush1.bf16.msra.mxu0 0
    %300 = vmatprep.subr.bf16.mxu0 0
    %301 = vmatpush1.bf16.msra.mxu0 0
    %302 = vmatprep.subr.bf16.mxu0 0
    %303 = vmatpush1.bf16.msra.mxu0 0
    %304 = vmatprep.subr.bf16.mxu0 0
    %305 = vmatpush1.bf16.msra.mxu0 0
    %306 = vmatprep.subr.bf16.mxu0 0
    %307 = vmatpush1.bf16.msra.mxu0 0
    %308 = vmatprep.subr.bf16.mxu0 0
    %309 = vmatpush1.bf16.msra.mxu0 0
    %310 = vmatprep.subr.bf16.mxu0 0
    %311 = vmatpush1.bf16.msra.mxu0 0
    %312 = vmatprep.mubr.bf16.mxu0 0
    %313 = vmatmul.mubr.bf16.gmra.mrb[0].mxu0 %v208
    %v314 = vpop.f32.mrb[0].mxu0
    %v315 = vadd.f32 %v230, %v314
    %v316 = vpop.f32.mrb[0].mxu0
    %v317 = vpop.f32.mrb[0].mxu0
    %v318 = vadd.f32 %v230, %v317
    %v319 = vpop.f32.mrb[0].mxu0
    %320 = vdwg.mxu0
    %321 = vst [vmem:[#allocation11] sm:$0xff] %v315
    %322 = vst [vmem:[#allocation11 + $0x8] sm:$0xff] %v318
    // Predicated region
    $region42: #{tpu_custom_call.1} parent=1 // pred_check
      _
    $region43: #{tpu_custom_call.1} parent=1 // pred_check_branch
      %324 = sbr.rel (0) target = $region45
    $region44: #{tpu_custom_call.1} parent=1 // pred_region
      %s326 = ssub.s32 256, 256
      %327 = vsyncadd [#allocation4], %s326
      %s328 = sshll.u32 [#allocation11], 4
      %s329 = int_to_ptr.vmem [resolvable:$true] %s328
      %334 = dma.vmem_to_hbm [thread:$0]  %s329, 256, %s5, [#allocation4], 128, 128, 8
    $region45: #{tpu_custom_call.1} parent=1 // pred_fallthru
      _
    // Predicated region
    $region46: #{tpu_custom_call.1} parent=1 // pred_check
      _
    $region47: #{tpu_custom_call.1} parent=1 // pred_check_branch
      %336 = sbr.rel (0) target = $region49
    $region48: #{tpu_custom_call.1} parent=1 // pred_region
      %337 = dma.done [#allocation4], 256
    $region49: #{tpu_custom_call.1} parent=1 // pred_fallthru
      _
    %338 = vsyncpa [#allocation3], 1
    %339 = vsyncpa [#allocation6], 1
    %340 = vsyncpa [#allocation9], 1
    %341 = vsyncpa [#allocation4], 1

</llo_original>
